<compile_context>
chip_gen: v5e
topology: v5e:2x2
jax: 0.10.0
libtpu: 0.0.40
codegen_flags: <defaults>
</compile_context>

<pallas_src>
import jax
import jax.numpy as jnp
from jax.experimental import pallas as pl
from jax.experimental.pallas import tpu as pltpu


def _round_up(n, m):
    return ((n + m - 1) // m) * m


def _choose_tile(B, tile_b):
    """Batch tile: block == full array for tiny B, otherwise a multiple of 128,
    capped by tile_b and capped so the 1-D grid has >= 2 steps (v7x megacore)."""
    if B <= 128:
        return B                              # single block == array extent (always legal)
    tile = min(_round_up(tile_b, 128), _round_up(pl.cdiv(B, 2), 128))
    return max(tile, 128)


def critic_kernel(x_ref, w1_ref, b1_ref, w2_ref, b2_ref,
                  w3_ref, b3_ref, w4_ref, b4_ref, o_ref):
    # Hidden layers: bf16 MXU matmuls, f32 accumulation, f32 tanh (EUP).
    h = jnp.tanh(
        jnp.dot(x_ref[...].astype(jnp.bfloat16), w1_ref[...],
                preferred_element_type=jnp.float32) + b1_ref[...])
    h = jnp.tanh(
        jnp.dot(h.astype(jnp.bfloat16), w2_ref[...],
                preferred_element_type=jnp.float32) + b2_ref[...])
    h = jnp.tanh(
        jnp.dot(h.astype(jnp.bfloat16), w3_ref[...],
                preferred_element_type=jnp.float32) + b3_ref[...])
    # Output head: VPU multiply + 64-wide lane reduction (avoids an N=1 MXU matmul).
    # The sublane->lane relayout of the result goes through the otherwise-idle XLU
    # and makes the store lane-dense.
    val = jnp.sum(h * w4_ref[...], axis=-1) + b4_ref[0]        # (tile,)
    o_ref[...] = val[None, :]                                  # (1, tile) dense store


def critic_forward(x, params, *, tile_b=8192):
    """Pallas forward pass. x: (B, D) float32 (or bfloat16). Returns (B, 1) float32."""
    B, D = x.shape
    tile = _choose_tile(B, tile_b)
    num_tiles = pl.cdiv(B, tile)

    # Tiny weights: bf16 for the MXU; biases f32; head weight as an f32 row for the
    # VPU; head bias as an SMEM scalar.  x is passed through untouched (no pad/cast
    # wrapper passes on the dominant HBM traffic).
    w1 = params["w1"].astype(jnp.bfloat16)
    w2 = params["w2"].astype(jnp.bfloat16)
    w3 = params["w3"].astype(jnp.bfloat16)
    b1, b2, b3 = params["b1"], params["b2"], params["b3"]
    w4 = params["w4"].reshape(1, 64).astype(jnp.float32)   # (64,1) -> (1,64) VPU row
    b4 = params["b4"].reshape(-1).astype(jnp.float32)      # (1,) scalar -> SMEM

    resident = lambda a: pl.BlockSpec(a.shape, lambda i: (0, 0))  # stays VMEM-resident

    flops = 2 * B * (D * 64 + 64 * 64 + 64 * 64 + 64)
    transcendentals = 3 * 64 * B
    bytes_accessed = (B * D * x.dtype.itemsize + B * 4          # x in, out
                      + (D * 64 + 2 * 64 * 64) * 2              # bf16 hidden weights
                      + (3 * 64 + 64 + 1) * 4)                  # f32 biases + head

    out = pl.pallas_call(
        critic_kernel,
        out_shape=jax.ShapeDtypeStruct((num_tiles, tile), jnp.float32),
        grid=(num_tiles,),
        in_specs=[
            pl.BlockSpec((tile, D), lambda i: (i, 0)),           # x streams over batch
            resident(w1), resident(b1),
            resident(w2), resident(b2),
            resident(w3), resident(b3),
            resident(w4),
            pl.BlockSpec(memory_space=pltpu.MemorySpace.SMEM),   # b4 scalar
        ],
        out_specs=pl.BlockSpec((1, tile), lambda i: (i, 0)),     # lane-dense output row
        compiler_params=pltpu.CompilerParams(
            dimension_semantics=("parallel",)),
        cost_estimate=pl.CostEstimate(flops=flops,
                                      transcendentals=transcendentals,
                                      bytes_accessed=bytes_accessed),
    )(x, w1, b1, w2, b2, w3, b3, w4, b4)

    # (num_tiles, tile) row-major == batch order; rows >= B (last partial tile) discarded.
    return out.reshape(-1)[:B].reshape(B, 1)


def init_params(key, input_shape):
    """Deterministic init mirroring the PyTorch module's parameter shapes.
    PyTorch Linear stores weight as (out, in); we store the transpose (in, out)."""
    dims = [(input_shape, 64), (64, 64), (64, 64), (64, 1)]
    params = {}
    for i, (d_in, d_out) in enumerate(dims, start=1):
        key, kw, kb = jax.random.split(key, 3)
        bound = 1.0 / jnp.sqrt(jnp.float32(d_in))  # matches nn.Linear default range
        params[f"w{i}"] = jax.random.uniform(
            kw, (d_in, d_out), jnp.float32, -bound, bound)
        params[f"b{i}"] = jax.random.uniform(
            kb, (1, d_out), jnp.float32, -bound, bound)
    return params


def critic_reference(x, params):
    h = jnp.tanh(x @ params["w1"] + params["b1"])
    h = jnp.tanh(h @ params["w2"] + params["b2"])
    h = jnp.tanh(h @ params["w3"] + params["b3"])
    return h @ params["w4"] + params["b4"]


if __name__ == "__main__":
    key = jax.random.PRNGKey(0)
    k_param, k_x, k_x2 = jax.random.split(key, 3)

    batch = 8
    input_shape = 32  # observation feature dimension

    params = init_params(k_param, input_shape)

    # Small demo batch (single tile, grid=(1,)).
    x = jax.random.normal(k_x, (batch, input_shape), dtype=jnp.float32)
    out = jax.block_until_ready(critic_forward(x, params))
    ref = critic_reference(x, params)
    assert out.shape == (batch, 1)
    # bf16 matmul operands vs f32 reference -> loose tolerance.
    assert jnp.allclose(out, ref, atol=5e-2, rtol=5e-2), \
        float(jnp.max(jnp.abs(out - ref)))

    # Multi-tile path: non-multiple batch with explicit small tile
    # (grid=(3,), partial last block, lane-dense (1, tile) output reassembly).
    x2 = jax.random.normal(k_x2, (300, input_shape), dtype=jnp.float32)
    out2 = jax.block_until_ready(critic_forward(x2, params, tile_b=128))
    ref2 = critic_reference(x2, params)
    assert out2.shape == (300, 1)
    assert jnp.allclose(out2, ref2, atol=5e-2, rtol=5e-2), \
        float(jnp.max(jnp.abs(out2 - ref2)))

    print("KERNEL_OK")
</pallas_src>

<mosaic_0001>
module attributes {stable_mosaic.version = 11 : i64} {
  func.func @critic_kernel(%arg0: i32, %arg1: memref<8x32xf32, #tpu.memory_space<vmem>>, %arg2: memref<32x64xbf16, #tpu.memory_space<vmem>>, %arg3: memref<1x64xf32, #tpu.memory_space<vmem>>, %arg4: memref<64x64xbf16, #tpu.memory_space<vmem>>, %arg5: memref<1x64xf32, #tpu.memory_space<vmem>>, %arg6: memref<64x64xbf16, #tpu.memory_space<vmem>>, %arg7: memref<1x64xf32, #tpu.memory_space<vmem>>, %arg8: memref<1x64xf32, #tpu.memory_space<vmem>>, %arg9: memref<1xf32, #tpu.memory_space<smem>>, %arg10: memref<1x8xf32, #tpu.memory_space<vmem>>) attributes {dimension_semantics = [#tpu.dimension_semantics<parallel>], iteration_bounds = array<i64: 1>, scalar_prefetch = 0 : i64, scratch_operands = 0 : i64, tpu.core_type = #tpu.core_type<tc>, window_params = [{transform_indices = @transform_0, window_bounds = array<i64: 8, 32>}, {pipeline_mode = #tpu.pipeline_mode<synchronous>, transform_indices = @transform_1, window_bounds = array<i64: 32, 64>}, {pipeline_mode = #tpu.pipeline_mode<synchronous>, transform_indices = @transform_2, window_bounds = array<i64: 1, 64>}, {pipeline_mode = #tpu.pipeline_mode<synchronous>, transform_indices = @transform_3, window_bounds = array<i64: 64, 64>}, {pipeline_mode = #tpu.pipeline_mode<synchronous>, transform_indices = @transform_4, window_bounds = array<i64: 1, 64>}, {pipeline_mode = #tpu.pipeline_mode<synchronous>, transform_indices = @transform_5, window_bounds = array<i64: 64, 64>}, {pipeline_mode = #tpu.pipeline_mode<synchronous>, transform_indices = @transform_6, window_bounds = array<i64: 1, 64>}, {pipeline_mode = #tpu.pipeline_mode<synchronous>, transform_indices = @transform_7, window_bounds = array<i64: 1, 64>}, {transform_indices = @transform_8, window_bounds = array<i64: 1>}, {transform_indices = @transform_9, window_bounds = array<i64: 1, 8>}]} {
    %c0 = arith.constant 0 : index
    %c0_0 = arith.constant 0 : index
    %0 = vector.load %arg1[%c0, %c0_0] : memref<8x32xf32, #tpu.memory_space<vmem>>, vector<8x32xf32>
    %1 = arith.truncf %0 : vector<8x32xf32> to vector<8x32xbf16>
    %c0_1 = arith.constant 0 : index
    %c0_2 = arith.constant 0 : index
    %2 = vector.load %arg2[%c0_1, %c0_2] : memref<32x64xbf16, #tpu.memory_space<vmem>>, vector<32x64xbf16>
    %cst = arith.constant dense<0.000000e+00> : vector<8x64xf32>
    %3 = tpu.matmul %1, %2, %cst {dimension_numbers = #tpu.dot_dimension_numbers<[1], [0], [0], [1], [0, 0, 1, 1], [], []>} : vector<8x32xbf16>, vector<32x64xbf16>, vector<8x64xf32> -> vector<8x64xf32>
    %c0_3 = arith.constant 0 : index
    %c0_4 = arith.constant 0 : index
    %4 = vector.load %arg3[%c0_3, %c0_4] : memref<1x64xf32, #tpu.memory_space<vmem>>, vector<1x64xf32>
    %5 = vector.broadcast %4 : vector<1x64xf32> to vector<8x64xf32>
    %6 = arith.addf %3, %5 : vector<8x64xf32>
    %7 = math.tanh %6 : vector<8x64xf32>
    %8 = arith.truncf %7 : vector<8x64xf32> to vector<8x64xbf16>
    %c0_5 = arith.constant 0 : index
    %c0_6 = arith.constant 0 : index
    %9 = vector.load %arg4[%c0_5, %c0_6] : memref<64x64xbf16, #tpu.memory_space<vmem>>, vector<64x64xbf16>
    %cst_7 = arith.constant dense<0.000000e+00> : vector<8x64xf32>
    %10 = tpu.matmul %8, %9, %cst_7 {dimension_numbers = #tpu.dot_dimension_numbers<[1], [0], [0], [1], [0, 0, 1, 1], [], []>} : vector<8x64xbf16>, vector<64x64xbf16>, vector<8x64xf32> -> vector<8x64xf32>
    %c0_8 = arith.constant 0 : index
    %c0_9 = arith.constant 0 : index
    %11 = vector.load %arg5[%c0_8, %c0_9] : memref<1x64xf32, #tpu.memory_space<vmem>>, vector<1x64xf32>
    %12 = vector.broadcast %11 : vector<1x64xf32> to vector<8x64xf32>
    %13 = arith.addf %10, %12 : vector<8x64xf32>
    %14 = math.tanh %13 : vector<8x64xf32>
    %15 = arith.truncf %14 : vector<8x64xf32> to vector<8x64xbf16>
    %c0_10 = arith.constant 0 : index
    %c0_11 = arith.constant 0 : index
    %16 = vector.load %arg6[%c0_10, %c0_11] : memref<64x64xbf16, #tpu.memory_space<vmem>>, vector<64x64xbf16>
    %cst_12 = arith.constant dense<0.000000e+00> : vector<8x64xf32>
    %17 = tpu.matmul %15, %16, %cst_12 {dimension_numbers = #tpu.dot_dimension_numbers<[1], [0], [0], [1], [0, 0, 1, 1], [], []>} : vector<8x64xbf16>, vector<64x64xbf16>, vector<8x64xf32> -> vector<8x64xf32>
    %c0_13 = arith.constant 0 : index
    %c0_14 = arith.constant 0 : index
    %18 = vector.load %arg7[%c0_13, %c0_14] : memref<1x64xf32, #tpu.memory_space<vmem>>, vector<1x64xf32>
    %19 = vector.broadcast %18 : vector<1x64xf32> to vector<8x64xf32>
    %20 = arith.addf %17, %19 : vector<8x64xf32>
    %21 = math.tanh %20 : vector<8x64xf32>
    %c0_15 = arith.constant 0 : index
    %c0_16 = arith.constant 0 : index
    %22 = vector.load %arg8[%c0_15, %c0_16] : memref<1x64xf32, #tpu.memory_space<vmem>>, vector<1x64xf32>
    %23 = vector.broadcast %22 : vector<1x64xf32> to vector<8x64xf32>
    %24 = arith.mulf %21, %23 : vector<8x64xf32>
    %cst_17 = arith.constant dense<0.000000e+00> : vector<8xf32>
    %25 = vector.multi_reduction <add>, %24, %cst_17 [1] : vector<8x64xf32> to vector<8xf32>
    %c0_18 = arith.constant 0 : index
    %26 = memref.load %arg9[%c0_18] : memref<1xf32, #tpu.memory_space<smem>>
    %27 = vector.broadcast %26 : f32 to vector<8xf32>
    %28 = arith.addf %25, %27 : vector<8xf32>
    %29 = vector.shape_cast %28 : vector<8xf32> to vector<1x8xf32>
    %c0_19 = arith.constant 0 : index
    %c0_20 = arith.constant 0 : index
    %30 = vector.load %arg10[%c0_19, %c0_20] : memref<1x8xf32, #tpu.memory_space<vmem>>, vector<1x8xf32>
    tpu.vector_store %arg10[%c0_19, %c0_20], %29 {strides = array<i32>} : memref<1x8xf32, #tpu.memory_space<vmem>>, vector<1x8xf32>,
    return
  }
  func.func @transform_0(%arg0: i32) -> (i32, i32) {
    %c0_i32 = arith.constant 0 : i32
    %c0_i32_0 = arith.constant 0 : i32
    return %arg0, %c0_i32 : i32, i32
  }
  func.func @transform_1(%arg0: i32) -> (i32, i32) {
    %c0_i32 = arith.constant 0 : i32
    %c0_i32_0 = arith.constant 0 : i32
    %c0_i32_1 = arith.constant 0 : i32
    return %c0_i32, %c0_i32_0 : i32, i32
  }
  func.func @transform_2(%arg0: i32) -> (i32, i32) {
    %c0_i32 = arith.constant 0 : i32
    %c0_i32_0 = arith.constant 0 : i32
    %c0_i32_1 = arith.constant 0 : i32
    return %c0_i32, %c0_i32_0 : i32, i32
  }
  func.func @transform_3(%arg0: i32) -> (i32, i32) {
    %c0_i32 = arith.constant 0 : i32
    %c0_i32_0 = arith.constant 0 : i32
    %c0_i32_1 = arith.constant 0 : i32
    return %c0_i32, %c0_i32_0 : i32, i32
  }
  func.func @transform_4(%arg0: i32) -> (i32, i32) {
    %c0_i32 = arith.constant 0 : i32
    %c0_i32_0 = arith.constant 0 : i32
    %c0_i32_1 = arith.constant 0 : i32
    return %c0_i32, %c0_i32_0 : i32, i32
  }
  func.func @transform_5(%arg0: i32) -> (i32, i32) {
    %c0_i32 = arith.constant 0 : i32
    %c0_i32_0 = arith.constant 0 : i32
    %c0_i32_1 = arith.constant 0 : i32
    return %c0_i32, %c0_i32_0 : i32, i32
  }
  func.func @transform_6(%arg0: i32) -> (i32, i32) {
    %c0_i32 = arith.constant 0 : i32
    %c0_i32_0 = arith.constant 0 : i32
    %c0_i32_1 = arith.constant 0 : i32
    return %c0_i32, %c0_i32_0 : i32, i32
  }
  func.func @transform_7(%arg0: i32) -> (i32, i32) {
    %c0_i32 = arith.constant 0 : i32
    %c0_i32_0 = arith.constant 0 : i32
    %c0_i32_1 = arith.constant 0 : i32
    return %c0_i32, %c0_i32_0 : i32, i32
  }
  func.func @transform_8(%arg0: i32) -> i32 {
    %c0_i32 = arith.constant 0 : i32
    %c0_i32_0 = arith.constant 0 : i32
    return %c0_i32 : i32
  }
  func.func @transform_9(%arg0: i32) -> (i32, i32) {
    %c0_i32 = arith.constant 0 : i32
    %c0_i32_0 = arith.constant 0 : i32
    return %arg0, %c0_i32 : i32, i32
  }
}

</mosaic_0001>

<llo_original>
// kernel: tpu_custom_call.1
$region0: #{tpu_custom_call.1}
  #allocation0 [shape = 'u32[]', space=smem, size = 0x4, offset = 0x4, fixed_abs, tag = 'smem constant byte address 0x4 - core index']
  #allocation1 [shape = 'u32[72,128]{1,0:T(1,128)}', space=vmem, size = 0x9000, scoped, tag = 'internal scratch']
  #allocation2 [shape = 'f32[1]{0:T(128)S(6)}', space=smem, size = 0x200, scoped, tag = 'scoped memory for tpu_custom_call.1']
  %s0 = inlined_call_operand.hbm [shape: f32[8,32], index: 0, kind: input, shape index: {}]
  %s1 = inlined_call_operand.hbm [shape: bf16[32,64], index: 1, kind: input, shape index: {}]
  %s2 = inlined_call_operand.vmem [shape: f32[1,64], index: 2, kind: input, shape index: {}]
  %s3 = inlined_call_operand.hbm [shape: bf16[64,64], index: 3, kind: input, shape index: {}]
  %s4 = inlined_call_operand.vmem [shape: f32[1,64], index: 4, kind: input, shape index: {}]
  %s5 = inlined_call_operand.hbm [shape: bf16[64,64], index: 5, kind: input, shape index: {}]
  %s6 = inlined_call_operand.vmem [shape: f32[1,64], index: 6, kind: input, shape index: {}]
  %s7 = inlined_call_operand.vmem [shape: f32[1,64], index: 7, kind: input, shape index: {}]
  %s8 = inlined_call_operand.<no memory space> [shape: f32[1], index: 8, kind: input, shape index: {}]
  %s9 = inlined_call_operand.hbm [shape: f32[1,8], index: 9, kind: output, shape index: {}]
  %s10 = sld [smem:[#allocation0]]
  $region62: #{tpu_custom_call.1} parent=0
    _
  %s12 = ssub.s32 1, %s10
  %s13 = scalar_select 0, %s12, %s10
  %14 = sst [smem:[#allocation2]] %s8
  $region1: #{tpu_custom_call.1} parent=0
    #allocation3 [shape = 'u8[4096]{0}', space=vmem, size = 0x1000, scoped, tag = 'input window, operand 0, single buffered']
    #allocation4 [shape = 's32[1]{0}', space=sflag, size = 0x4, scoped, tag = 'scoped memory for tpu_custom_call.1']
    #allocation5 [shape = 's32[1]{0}', space=sflag, size = 0x4, scoped, tag = 'scoped memory for tpu_custom_call.1']
    #allocation6 [shape = 'u8[8192]{0}', space=vmem, size = 0x2000, scoped, tag = 'input window, operand 1, single buffered']
    #allocation7 [shape = 's32[1]{0}', space=sflag, size = 0x4, scoped, tag = 'scoped memory for tpu_custom_call.1']
    #allocation8 [shape = 'u8[16384]{0}', space=vmem, size = 0x4000, scoped, tag = 'input window, operand 3, single buffered']
    #allocation9 [shape = 'u8[16384]{0}', space=vmem, size = 0x4000, scoped, tag = 'input window, operand 5, single buffered']
    #allocation10 [shape = 's32[1]{0}', space=sflag, size = 0x4, scoped, tag = 'scoped memory for tpu_custom_call.1']
    #allocation11 [shape = 'u8[512]{0}', space=vmem, size = 0x400, scoped, tag = 'output window, operand 0, single buffered']
    %15 = vsyncpa [#allocation4], 0
    %16 = vsyncpa [#allocation7], 0
    %17 = vsyncpa [#allocation10], 0
    %18 = vsyncpa [#allocation5], 0
    // Predicated region
    $region2: #{tpu_custom_call.1} parent=1 // pred_check
      _
    $region3: #{tpu_custom_call.1} parent=1 // pred_check_branch
      %20 = sbr.rel (0) target = $region5
    $region4: #{tpu_custom_call.1} parent=1 // pred_region
      %22 = vsyncadd [#allocation4], 0
      %s24 = sshll.u32 %s0, 4
      %s25 = int_to_ptr.hbm [resolvable:$true] %s24
      %s26 = sshll.u32 [#allocation3], 4
      %s27 = int_to_ptr.vmem [resolvable:$true] %s26
      %29 = dma.hbm_to_vmem [thread:$0]  %s25, 128, %s27, [#allocation4]
    $region5: #{tpu_custom_call.1} parent=1 // pred_fallthru
      _
    // Predicated region
    $region6: #{tpu_custom_call.1} parent=1 // pred_check
      _
    $region7: #{tpu_custom_call.1} parent=1 // pred_check_branch
      %31 = sbr.rel (0) target = $region9
    $region8: #{tpu_custom_call.1} parent=1 // pred_region
      %33 = vsyncadd [#allocation7], 0
      %s34 = sshll.u32 %s1, 4
      %s35 = int_to_ptr.hbm [resolvable:$true] %s34
      %s36 = sshll.u32 [#allocation6], 4
      %s37 = int_to_ptr.vmem [resolvable:$true] %s36
      %42 = dma.hbm_to_vmem [thread:$0]  %s35, 256, %s37, [#allocation7], 64, 64, 4
    $region9: #{tpu_custom_call.1} parent=1 // pred_fallthru
      _
    // Predicated region
    $region10: #{tpu_custom_call.1} parent=1 // pred_check
      _
    $region11: #{tpu_custom_call.1} parent=1 // pred_check_branch
      %44 = sbr.rel (0) target = $region13
    $region12: #{tpu_custom_call.1} parent=1 // pred_region
      _
    $region13: #{tpu_custom_call.1} parent=1 // pred_fallthru
      _
    // Predicated region
    $region14: #{tpu_custom_call.1} parent=1 // pred_check
      _
    $region15: #{tpu_custom_call.1} parent=1 // pred_check_branch
      %46 = sbr.rel (0) target = $region17
    $region16: #{tpu_custom_call.1} parent=1 // pred_region
      %48 = vsyncadd [#allocation7], 0
      %s49 = sshll.u32 %s3, 4
      %s50 = int_to_ptr.hbm [resolvable:$true] %s49
      %s51 = sshll.u32 [#allocation8], 4
      %s52 = int_to_ptr.vmem [resolvable:$true] %s51
      %57 = dma.hbm_to_vmem [thread:$0]  %s50, 512, %s52, [#allocation7], 64, 64, 4
    $region17: #{tpu_custom_call.1} parent=1 // pred_fallthru
      _
    // Predicated region
    $region18: #{tpu_custom_call.1} parent=1 // pred_check
      _
    $region19: #{tpu_custom_call.1} parent=1 // pred_check_branch
      %59 = sbr.rel (0) target = $region21
    $region20: #{tpu_custom_call.1} parent=1 // pred_region
      _
    $region21: #{tpu_custom_call.1} parent=1 // pred_fallthru
      _
    // Predicated region
    $region22: #{tpu_custom_call.1} parent=1 // pred_check
      _
    $region23: #{tpu_custom_call.1} parent=1 // pred_check_branch
      %61 = sbr.rel (0) target = $region25
    $region24: #{tpu_custom_call.1} parent=1 // pred_region
      %63 = vsyncadd [#allocation10], 0
      %s64 = sshll.u32 %s5, 4
      %s65 = int_to_ptr.hbm [resolvable:$true] %s64
      %s66 = sshll.u32 [#allocation9], 4
      %s67 = int_to_ptr.vmem [resolvable:$true] %s66
      %72 = dma.hbm_to_vmem [thread:$0]  %s65, 512, %s67, [#allocation10], 64, 64, 4
    $region25: #{tpu_custom_call.1} parent=1 // pred_fallthru
      _
    // Predicated region
    $region26: #{tpu_custom_call.1} parent=1 // pred_check
      _
    $region27: #{tpu_custom_call.1} parent=1 // pred_check_branch
      %74 = sbr.rel (0) target = $region29
    $region28: #{tpu_custom_call.1} parent=1 // pred_region
      _
    $region29: #{tpu_custom_call.1} parent=1 // pred_fallthru
      _
    // Predicated region
    $region30: #{tpu_custom_call.1} parent=1 // pred_check
      _
    $region31: #{tpu_custom_call.1} parent=1 // pred_check_branch
      %76 = sbr.rel (0) target = $region33
    $region32: #{tpu_custom_call.1} parent=1 // pred_region
      _
    $region33: #{tpu_custom_call.1} parent=1 // pred_fallthru
      _
    // Predicated region
    $region34: #{tpu_custom_call.1} parent=1 // pred_check
      _
    $region35: #{tpu_custom_call.1} parent=1 // pred_check_branch
      %78 = sbr.rel (0) target = $region37
    $region36: #{tpu_custom_call.1} parent=1 // pred_region
      _
    $region37: #{tpu_custom_call.1} parent=1 // pred_fallthru
      _
    // Predicated region
    $region38: #{tpu_custom_call.1} parent=1 // pred_check
      _
    $region39: #{tpu_custom_call.1} parent=1 // pred_check_branch
      %80 = sbr.rel (0) target = $region41
    $region40: #{tpu_custom_call.1} parent=1 // pred_region
      %82 = dma.done [#allocation4], 128
    $region41: #{tpu_custom_call.1} parent=1 // pred_fallthru
      _
    // Predicated region
    $region42: #{tpu_custom_call.1} parent=1 // pred_check
      _
    $region43: #{tpu_custom_call.1} parent=1 // pred_check_branch
      %84 = sbr.rel (0) target = $region45
    $region44: #{tpu_custom_call.1} parent=1 // pred_region
      %86 = dma.done [#allocation7], 256
    $region45: #{tpu_custom_call.1} parent=1 // pred_fallthru
      _
    // Predicated region
    $region46: #{tpu_custom_call.1} parent=1 // pred_check
      _
    $region47: #{tpu_custom_call.1} parent=1 // pred_check_branch
      %88 = sbr.rel (0) target = $region49
    $region48: #{tpu_custom_call.1} parent=1 // pred_region
      %90 = dma.done [#allocation7], 512
    $region49: #{tpu_custom_call.1} parent=1 // pred_fallthru
      _
    // Predicated region
    $region50: #{tpu_custom_call.1} parent=1 // pred_check
      _
    $region51: #{tpu_custom_call.1} parent=1 // pred_check_branch
      %92 = sbr.rel (0) target = $region53
    $region52: #{tpu_custom_call.1} parent=1 // pred_region
      %94 = dma.done [#allocation10], 512
    $region53: #{tpu_custom_call.1} parent=1 // pred_fallthru
      _
    %v96 = vld [vmem:[#allocation3] sm:$0xff]
    %v97 = vpack.c.bf16 %v96, %v96
    %v98 = vld [vmem:[#allocation6] sm:$0xf]
    %v99 = vld [vmem:[#allocation6 + $0x4] sm:$0xf]
    %v100 = vld [vmem:[#allocation6 + $0x8] sm:$0xf]
    %v101 = vld [vmem:[#allocation6 + $0xc] sm:$0xf]
    %v102 = vld [vmem:[%s2] sm:$0x1]
    %v104 = vperm.slane %v102, 0
    %v110 = vunpack.c.l.b16 %v98
    %v111 = vunpack.c.l.b16 %v99
    %v112 = vunpack.c.l.b16 %v100
    %v113 = vunpack.c.l.b16 %v101
    %v114 = vpack.c.b16 %v111, %v110
    %v115 = vpack.c.b16 %v113, %v112
    %vm118 = vcmask 261120
    %v120 = vsel %vm118, %v97, 0
    %122 = vmatpush.bf16.msra.mxu0 0
    %123 = vmatpush.bf16.msra.mxu0 0
    %124 = vmatpush.bf16.msra.mxu0 0
    %125 = vmatpush.bf16.msra.mxu0 0
    %126 = vmatpush.bf16.msra.mxu0 0
    %127 = vmatpush.bf16.msra.mxu0 0
    %128 = vmatpush.bf16.msra.mxu0 %v115
    %129 = vmatpush.bf16.msra.mxu0 %v114
    %130 = vmatmul.bf16.gmra.mxu0 %v120
    %v131 = vpop.f32.mrf.mxu0
    %v132 = vadd.f32 %v104, %v131
    %v133 = vpop.f32.mrf.mxu0
    %134 = vdwg.mxu0
    %v135 = vtanh.pop %v132
    %v136 = vpack.c.bf16 %v135, %v135
    %v137 = vld [vmem:[#allocation8] sm:$0xf]
    %v138 = vld [vmem:[#allocation8 + $0x4] sm:$0xf]
    %v139 = vld [vmem:[#allocation8 + $0x8] sm:$0xf]
    %v140 = vld [vmem:[#allocation8 + $0xc] sm:$0xf]
    %v141 = vld [vmem:[#allocation8 + $0x10] sm:$0xf]
    %v142 = vld [vmem:[#allocation8 + $0x14] sm:$0xf]
    %v143 = vld [vmem:[#allocation8 + $0x18] sm:$0xf]
    %v144 = vld [vmem:[#allocation8 + $0x1c] sm:$0xf]
    %v145 = vld [vmem:[%s4] sm:$0x1]
    %v147 = vperm.slane %v145, 0
    %v157 = vunpack.c.l.b16 %v137
    %v158 = vunpack.c.l.b16 %v138
    %v159 = vunpack.c.l.b16 %v139
    %v160 = vunpack.c.l.b16 %v140
    %v161 = vunpack.c.l.b16 %v141
    %v162 = vunpack.c.l.b16 %v142
    %v163 = vunpack.c.l.b16 %v143
    %v164 = vunpack.c.l.b16 %v144
    %v165 = vpack.c.b16 %v158, %v157
    %v166 = vpack.c.b16 %v160, %v159
    %v167 = vpack.c.b16 %v162, %v161
    %v168 = vpack.c.b16 %v164, %v163
    %vm173 = vcmask 523264
    %v175 = vsel %vm173, %v136, 0
    %177 = vmatpush.bf16.msra.mxu0 0
    %178 = vmatpush.bf16.msra.mxu0 0
    %179 = vmatpush.bf16.msra.mxu0 0
    %180 = vmatpush.bf16.msra.mxu0 0
    %181 = vmatpush.bf16.msra.mxu0 %v168
    %182 = vmatpush.bf16.msra.mxu0 %v167
    %183 = vmatpush.bf16.msra.mxu0 %v166
    %184 = vmatpush.bf16.msra.mxu0 %v165
    %185 = vmatmul.bf16.gmra.mxu0 %v175
    %v186 = vpop.f32.mrf.mxu0
    %v187 = vadd.f32 %v147, %v186
    %v188 = vpop.f32.mrf.mxu0
    %189 = vdwg.mxu0
    %v190 = vtanh.pop %v187
    %v191 = vpack.c.bf16 %v190, %v190
    %v192 = vld [vmem:[#allocation9] sm:$0xf]
    %v193 = vld [vmem:[#allocation9 + $0x4] sm:$0xf]
    %v194 = vld [vmem:[#allocation9 + $0x8] sm:$0xf]
    %v195 = vld [vmem:[#allocation9 + $0xc] sm:$0xf]
    %v196 = vld [vmem:[#allocation9 + $0x10] sm:$0xf]
    %v197 = vld [vmem:[#allocation9 + $0x14] sm:$0xf]
    %v198 = vld [vmem:[#allocation9 + $0x18] sm:$0xf]
    %v199 = vld [vmem:[#allocation9 + $0x1c] sm:$0xf]
    %v200 = vld [vmem:[%s6] sm:$0x1]
    %v202 = vperm.slane %v200, 0
    %v212 = vunpack.c.l.b16 %v192
    %v213 = vunpack.c.l.b16 %v193
    %v214 = vunpack.c.l.b16 %v194
    %v215 = vunpack.c.l.b16 %v195
    %v216 = vunpack.c.l.b16 %v196
    %v217 = vunpack.c.l.b16 %v197
    %v218 = vunpack.c.l.b16 %v198
    %v219 = vunpack.c.l.b16 %v199
    %v220 = vpack.c.b16 %v213, %v212
    %v221 = vpack.c.b16 %v215, %v214
    %v222 = vpack.c.b16 %v217, %v216
    %v223 = vpack.c.b16 %v219, %v218
    %v229 = vsel %vm173, %v191, 0
    %231 = vmatpush.bf16.msra.mxu0 0
    %232 = vmatpush.bf16.msra.mxu0 0
    %233 = vmatpush.bf16.msra.mxu0 0
    %234 = vmatpush.bf16.msra.mxu0 0
    %235 = vmatpush.bf16.msra.mxu0 %v223
    %236 = vmatpush.bf16.msra.mxu0 %v222
    %237 = vmatpush.bf16.msra.mxu0 %v221
    %238 = vmatpush.bf16.msra.mxu0 %v220
    %239 = vmatmul.bf16.gmra.mxu0 %v229
    %v240 = vpop.f32.mrf.mxu0
    %v241 = vadd.f32 %v202, %v240
    %v242 = vpop.f32.mrf.mxu0
    %243 = vdwg.mxu0
    %v244 = vtanh.pop %v241
    %v245 = vld [vmem:[%s7] sm:$0x1]
    %v247 = vperm.slane %v245, 0
    %v249 = vmul.f32 %v244, %v247
    %v250 = vsel %vm173, %v249, 0.0
    %251 = vadd.xlane.f32.xlu0 %v250
    %v252 = vpop.xlane.xlu0 %251
    %s253 = sld [smem:[#allocation2]]
    %v254 = vstv %s253
    %v255 = vadd.f32 %v252, %v254
    %v257 = vlaneseq
    %v258 = vand.u32 %v257, 127
    %v259 = vperm.slane %v255, %v258
    %vm261 = vcmask 57344
    %262 = vst.msk [vmem:[#allocation11] sm:$0x1] %vm261, %v259
    // Predicated region
    $region54: #{tpu_custom_call.1} parent=1 // pred_check
      _
    $region55: #{tpu_custom_call.1} parent=1 // pred_check_branch
      %264 = sbr.rel (0) target = $region57
    $region56: #{tpu_custom_call.1} parent=1 // pred_region
      %266 = vsyncadd [#allocation5], 0
      %s268 = sshll.u32 [#allocation11], 4
      %s269 = int_to_ptr.vmem [resolvable:$true] %s268
      %s270 = sshll.u32 %s9, 4
      %s271 = int_to_ptr.hbm [resolvable:$true] %s270
      %273 = dma.vmem_to_hbm [thread:$0]  %s269, 16, %s271, [#allocation5]
    $region57: #{tpu_custom_call.1} parent=1 // pred_fallthru
      _
    // Predicated region
    $region58: #{tpu_custom_call.1} parent=1 // pred_check
      _
    $region59: #{tpu_custom_call.1} parent=1 // pred_check_branch
      %275 = sbr.rel (0) target = $region61
    $region60: #{tpu_custom_call.1} parent=1 // pred_region
      %277 = dma.done [#allocation5], 16
    $region61: #{tpu_custom_call.1} parent=1 // pred_fallthru
      _
    %278 = vsyncpa [#allocation4], 1
    %279 = vsyncpa [#allocation7], 1
    %280 = vsyncpa [#allocation10], 1
    %281 = vsyncpa [#allocation5], 1

</llo_original>
